<compile_context>
chip_gen: v7x
topology: tpu7x:2x2x1
jax: 0.10.0
libtpu: 0.0.40
codegen_flags: <defaults>
</compile_context>

<pallas_src>
import functools

import jax
import jax.numpy as jnp
from jax import lax
from jax.experimental import pallas as pl
from jax.experimental.pallas import tpu as pltpu


def _conv_act_kernel(x_ref, w_ref, b_ref, o_ref, *, s):
    """One grid step: one batch image x one (H_out row-block, W_out tile).

    x_ref: (1, Hp, K_pad)        padded image, (W, C_in) flattened + lane-padded
    w_ref: (f, K_pad, C_out*tw)  per-kh folded conv weights (grid-invariant per wb)
    b_ref: (1, C_out*tw)         lane-dense bias, (co, w)-ordered, f32
    o_ref: (1, C_out, th, tw)    NCHW output block
    """
    f = w_ref.shape[0]
    c_out, th, tw = o_ref.shape[1], o_ref.shape[2], o_ref.shape[3]

    h0 = pl.program_id(1) * (th * s)
    if (th * s) % 8 == 0:
        h0 = pl.multiple_of(h0, 8)          # aligned sublane window start

    acc = jnp.zeros((th, c_out * tw), jnp.float32)
    for kh in range(f):                     # f is small & static -> unrolled
        if s == 1:
            rows = x_ref[0, pl.ds(h0 + kh, th), :]
        else:
            # For large strides, fold the stride into a halo-window DMA
            # instead of a sublane-strided load (not needed at demo scale).
            rows = x_ref[0, pl.ds(h0 + kh, th, stride=s), :]
        acc += jnp.dot(rows, w_ref[kh], preferred_element_type=jnp.float32)

    acc = acc + b_ref[...]                  # f32 epilogue (v5e has no bf16 VPU)
    y = (acc / (1.0 + jnp.abs(acc))).astype(o_ref.dtype)   # exact Softsign

    # Fused NHWC->NCHW: lanes are (co, w)-ordered, so channel co is a
    # contiguous tw-lane slice; store it straight into the NCHW block.
    for co in range(c_out):
        o_ref[0, co] = y[:, co * tw:(co + 1) * tw]


def _round_up(x, m):
    return -(-x // m) * m


def _pick_h_tile(h_out, n):
    """Take the whole H_out per step (max matmul M, fewest grid steps); only
    split when a single image must feed both v7x TensorCores."""
    if n == 1 and h_out % 16 == 0:
        return h_out // 2
    return h_out


def _pick_w_tile(w_out, c_out, cap=2048):
    """Bound the folded-weight lane width as W grows.  Any split must keep
    the NCHW output block's minor dim a multiple of 128."""
    tw = w_out
    while tw * c_out > cap and tw % 256 == 0:
        tw //= 2
    return tw


@functools.partial(jax.jit, static_argnames=("f", "s", "p", "compute_dtype"))
def conv_act(x_nchw, weight, bias, *, f, s, p, compute_dtype=jnp.bfloat16):
    """Forward pass of ConvAct (Conv2d + Softsign).

    x_nchw:  (N, C_in, H, W)   weight: (C_out, C_in, f, f)   bias: (C_out,)
    returns: (N, C_out, H_out, W_out)
    compute_dtype: dtype fed to the MXU (default bf16 — MXU-native on
    v6e/v7x and halves the dominant input-stream bytes); accumulation, bias
    add and the softsign epilogue stay f32.
    """
    N, C_in, H, W = x_nchw.shape
    C_out = weight.shape[0]
    H_out = (H + 2 * p - f) // s + 1
    W_out = (W + 2 * p - f) // s + 1
    Hp, Wp = H + 2 * p, W + 2 * p
    K = Wp * C_in
    K_pad = _round_up(K, 128)
    cdt = compute_dtype if compute_dtype is not None else x_nchw.dtype

    th = _pick_h_tile(H_out, N)
    tw = _pick_w_tile(W_out, C_out)
    assert H_out % th == 0 and (th % 8 == 0 or th == H_out), (th, H_out)
    assert W_out % tw == 0 and (tw % 128 == 0 or tw == W_out), (tw, W_out)
    n_hb, n_wb = H_out // th, W_out // tw
    lane_blk = C_out * tw

    # NCHW -> NHWC, spatial pad, flatten (W, C_in) into lanes, zero-pad lanes
    # up to a multiple of 128 (unmasked vld + MXU-aligned K).
    x_nhwc = jnp.transpose(x_nchw, (0, 2, 3, 1))
    x_pad = jnp.pad(x_nhwc, ((0, 0), (p, p), (p, p), (0, 0)))
    x_flat = x_pad.reshape(N, Hp, K)
    if K_pad != K:
        x_flat = jnp.pad(x_flat, ((0, 0), (0, 0), (0, K_pad - K)))
    x_flat = x_flat.astype(cdt)

    # Fold kw (and the W stride) into a per-kh weight matrix:
    #   wk[kh, (w*s+kw)*C_in + ci, (wb, co, wl)] = weight[co, ci, kh, kw]
    # The (co, wl) lane order lets the kernel peel channels with contiguous
    # lane slices (fused NCHW epilogue).
    w_t = jnp.transpose(weight, (2, 3, 1, 0))                      # (f, f, C_in, C_out)
    sel = (jnp.arange(Wp)[None, None, :] ==
           (jnp.arange(W_out)[:, None, None] * s
            + jnp.arange(f)[None, :, None])).astype(weight.dtype)  # (W_out, f, Wp)
    wk = jnp.einsum('wkv,hkcd->hvcdw', sel, w_t)                   # (f, Wp, C_in, C_out, W_out)
    wk = wk.reshape(f, K, C_out, W_out)
    if K_pad != K:
        wk = jnp.pad(wk, ((0, 0), (0, K_pad - K), (0, 0), (0, 0)))
    wk = wk.reshape(f, K_pad, C_out, n_wb, tw)
    wk = jnp.transpose(wk, (0, 1, 3, 2, 4)).reshape(f, K_pad, n_wb * lane_blk)
    wk = wk.astype(cdt)

    # Lane-dense bias, (co, wl)-ordered per wb tile.  Kept f32.
    b_lane = jnp.tile(jnp.repeat(bias.astype(jnp.float32), tw), n_wb)
    b_lane = b_lane.reshape(1, n_wb * lane_blk)

    kernel = functools.partial(_conv_act_kernel, s=s)
    out = pl.pallas_call(
        kernel,
        out_shape=jax.ShapeDtypeStruct((N, C_out, H_out, W_out), x_nchw.dtype),
        grid_spec=pltpu.PrefetchScalarGridSpec(
            num_scalar_prefetch=0,
            grid=(N, n_hb, n_wb),            # N leading -> megacore splits on batch
            in_specs=[
                # Whole padded image per batch element; constant across
                # (hb, wb) -> fetched once per image.  (At much larger
                # H/W/C, replace with a th*s+f-1 halo-row window per step.)
                pl.BlockSpec((1, Hp, K_pad), lambda n, hb, wb: (n, 0, 0)),
                pl.BlockSpec((f, K_pad, lane_blk), lambda n, hb, wb: (0, 0, wb)),
                pl.BlockSpec((1, lane_blk), lambda n, hb, wb: (0, wb)),
            ],
            out_specs=pl.BlockSpec((1, C_out, th, tw),
                                   lambda n, hb, wb: (n, 0, hb, wb)),
        ),
        compiler_params=pltpu.CompilerParams(
            dimension_semantics=("parallel", "parallel", "parallel")),
    )(x_flat, wk, b_lane)
    return out


if __name__ == "__main__":
    # Small shapes consistent with the module: batch=2, in_ch=4, out_ch=8,
    # spatial 16x16, f=3, stride=1, padding=1.
    N, C_in, H, W = 2, 4, 16, 16
    C_out, f, s, p = 8, 3, 1, 1

    key = jax.random.PRNGKey(0)
    kx, kw_, kb = jax.random.split(key, 3)
    x = jax.random.normal(kx, (N, C_in, H, W), dtype=jnp.float32)
    fan_in = C_in * f * f
    bound = 1.0 / (fan_in ** 0.5)
    weight = jax.random.uniform(kw_, (C_out, C_in, f, f),
                                minval=-bound, maxval=bound, dtype=jnp.float32)
    bias = jax.random.uniform(kb, (C_out,), minval=-bound, maxval=bound,
                              dtype=jnp.float32)

    # Reference: XLA conv (full precision) + exact softsign, all f32.
    ref = lax.conv_general_dilated(
        x, weight, window_strides=(s, s), padding=[(p, p), (p, p)],
        dimension_numbers=("NCHW", "OIHW", "NCHW"),
        precision=lax.Precision.HIGHEST)
    ref = ref + bias[None, :, None, None]
    ref = ref / (1.0 + jnp.abs(ref))

    # 1) Strict f32 MXU path: exact softsign + f32 matmul -> tight tolerance.
    out_f32 = jax.block_until_ready(
        conv_act(x, weight, bias, f=f, s=s, p=p, compute_dtype=jnp.float32))
    assert out_f32.shape == (N, C_out, H, W)
    err32 = float(jnp.max(jnp.abs(out_f32 - ref)))
    assert err32 < 2e-4, f"f32 path max abs err {err32}"

    # 2) Default bf16 MXU operands (f32 accumulation/epilogue): bandwidth path.
    out_bf16 = jax.block_until_ready(conv_act(x, weight, bias, f=f, s=s, p=p))
    assert out_bf16.shape == (N, C_out, H, W)
    errbf = float(jnp.max(jnp.abs(out_bf16 - ref)))
    assert errbf < 2e-2, f"bf16 path max abs err {errbf}"

    print("KERNEL_OK")
</pallas_src>

<mosaic_0001>
module attributes {stable_mosaic.version = 11 : i64} {
  func.func @_conv_act_kernel(%arg0: i32, %arg1: i32, %arg2: i32, %arg3: memref<1x18x128xf32, #tpu.memory_space<vmem>>, %arg4: memref<3x128x128xf32, #tpu.memory_space<vmem>>, %arg5: memref<1x128xf32, #tpu.memory_space<vmem>>, %arg6: memref<1x8x16x16xf32, #tpu.memory_space<vmem>>) attributes {dimension_semantics = [#tpu.dimension_semantics<parallel>, #tpu.dimension_semantics<parallel>, #tpu.dimension_semantics<parallel>], iteration_bounds = array<i64: 2, 1, 1>, scalar_prefetch = 0 : i64, scratch_operands = 0 : i64, tpu.core_type = #tpu.core_type<tc>, window_params = [{transform_indices = @transform_0, window_bounds = array<i64: 1, 18, 128>}, {transform_indices = @transform_1, window_bounds = array<i64: 3, 128, 128>}, {transform_indices = @transform_2, window_bounds = array<i64: 1, 128>}, {transform_indices = @transform_3, window_bounds = array<i64: 1, 8, 16, 16>}]} {
    %c16_i32 = arith.constant 16 : i32
    %0 = arith.muli %arg1, %c16_i32 : i32
    %1 = tpu.assume_multiple %0, 8 : i32
    %cst = arith.constant 0.000000e+00 : f32
    %2 = vector.broadcast %cst : f32 to vector<16x128xf32>
    %c0_i32 = arith.constant 0 : i32
    %3 = arith.addi %1, %c0_i32 : i32
    %c0 = arith.constant 0 : index
    %4 = arith.index_cast %3 : i32 to index
    %c0_0 = arith.constant 0 : index
    %5 = vector.load %arg3[%c0, %4, %c0_0] : memref<1x18x128xf32, #tpu.memory_space<vmem>>, vector<1x16x128xf32>
    %6 = vector.shape_cast %5 : vector<1x16x128xf32> to vector<16x128xf32>
    %c0_1 = arith.constant 0 : index
    %c0_2 = arith.constant 0 : index
    %c0_3 = arith.constant 0 : index
    %7 = vector.load %arg4[%c0_1, %c0_2, %c0_3] : memref<3x128x128xf32, #tpu.memory_space<vmem>>, vector<1x128x128xf32>
    %8 = vector.shape_cast %7 : vector<1x128x128xf32> to vector<128x128xf32>
    %cst_4 = arith.constant dense<0.000000e+00> : vector<16x128xf32>
    %9 = tpu.matmul %6, %8, %cst_4 {dimension_numbers = #tpu.dot_dimension_numbers<[1], [0], [0], [1], [0, 0, 1, 1], [], []>} : vector<16x128xf32>, vector<128x128xf32>, vector<16x128xf32> -> vector<16x128xf32>
    %10 = arith.addf %2, %9 : vector<16x128xf32>
    %c1_i32 = arith.constant 1 : i32
    %11 = arith.addi %1, %c1_i32 : i32
    %c0_5 = arith.constant 0 : index
    %12 = arith.index_cast %11 : i32 to index
    %c0_6 = arith.constant 0 : index
    %13 = vector.load %arg3[%c0_5, %12, %c0_6] : memref<1x18x128xf32, #tpu.memory_space<vmem>>, vector<1x16x128xf32>
    %14 = vector.shape_cast %13 : vector<1x16x128xf32> to vector<16x128xf32>
    %c1 = arith.constant 1 : index
    %c0_7 = arith.constant 0 : index
    %c0_8 = arith.constant 0 : index
    %15 = vector.load %arg4[%c1, %c0_7, %c0_8] : memref<3x128x128xf32, #tpu.memory_space<vmem>>, vector<1x128x128xf32>
    %16 = vector.shape_cast %15 : vector<1x128x128xf32> to vector<128x128xf32>
    %cst_9 = arith.constant dense<0.000000e+00> : vector<16x128xf32>
    %17 = tpu.matmul %14, %16, %cst_9 {dimension_numbers = #tpu.dot_dimension_numbers<[1], [0], [0], [1], [0, 0, 1, 1], [], []>} : vector<16x128xf32>, vector<128x128xf32>, vector<16x128xf32> -> vector<16x128xf32>
    %18 = arith.addf %10, %17 : vector<16x128xf32>
    %c2_i32 = arith.constant 2 : i32
    %19 = arith.addi %1, %c2_i32 : i32
    %c0_10 = arith.constant 0 : index
    %20 = arith.index_cast %19 : i32 to index
    %c0_11 = arith.constant 0 : index
    %21 = vector.load %arg3[%c0_10, %20, %c0_11] : memref<1x18x128xf32, #tpu.memory_space<vmem>>, vector<1x16x128xf32>
    %22 = vector.shape_cast %21 : vector<1x16x128xf32> to vector<16x128xf32>
    %c2 = arith.constant 2 : index
    %c0_12 = arith.constant 0 : index
    %c0_13 = arith.constant 0 : index
    %23 = vector.load %arg4[%c2, %c0_12, %c0_13] : memref<3x128x128xf32, #tpu.memory_space<vmem>>, vector<1x128x128xf32>
    %24 = vector.shape_cast %23 : vector<1x128x128xf32> to vector<128x128xf32>
    %cst_14 = arith.constant dense<0.000000e+00> : vector<16x128xf32>
    %25 = tpu.matmul %22, %24, %cst_14 {dimension_numbers = #tpu.dot_dimension_numbers<[1], [0], [0], [1], [0, 0, 1, 1], [], []>} : vector<16x128xf32>, vector<128x128xf32>, vector<16x128xf32> -> vector<16x128xf32>
    %26 = arith.addf %18, %25 : vector<16x128xf32>
    %c0_15 = arith.constant 0 : index
    %c0_16 = arith.constant 0 : index
    %27 = vector.load %arg5[%c0_15, %c0_16] : memref<1x128xf32, #tpu.memory_space<vmem>>, vector<1x128xf32>
    %28 = vector.broadcast %27 : vector<1x128xf32> to vector<16x128xf32>
    %29 = arith.addf %26, %28 : vector<16x128xf32>
    %30 = math.absf %29 : vector<16x128xf32>
    %cst_17 = arith.constant 1.000000e+00 : f32
    %31 = vector.broadcast %cst_17 : f32 to vector<16x128xf32>
    %32 = arith.addf %31, %30 : vector<16x128xf32>
    %33 = arith.divf %29, %32 : vector<16x128xf32>
    %34 = vector.extract_strided_slice %33 {offsets = [0, 0], sizes = [16, 16], strides = [1, 1]} : vector<16x128xf32> to vector<16x16xf32>
    %c0_18 = arith.constant 0 : index
    %c0_19 = arith.constant 0 : index
    %c0_20 = arith.constant 0 : index
    %c0_21 = arith.constant 0 : index
    %35 = vector.load %arg6[%c0_18, %c0_19, %c0_20, %c0_21] : memref<1x8x16x16xf32, #tpu.memory_space<vmem>>, vector<1x1x16x16xf32>
    %36 = vector.shape_cast %35 : vector<1x1x16x16xf32> to vector<16x16xf32>
    %37 = vector.shape_cast %34 : vector<16x16xf32> to vector<1x1x16x16xf32>
    tpu.vector_store %arg6[%c0_18, %c0_19, %c0_20, %c0_21], %37 {strides = array<i32>} : memref<1x8x16x16xf32, #tpu.memory_space<vmem>>, vector<1x1x16x16xf32>,
    %38 = vector.extract_strided_slice %33 {offsets = [0, 16], sizes = [16, 16], strides = [1, 1]} : vector<16x128xf32> to vector<16x16xf32>
    %c0_22 = arith.constant 0 : index
    %c1_23 = arith.constant 1 : index
    %c0_24 = arith.constant 0 : index
    %c0_25 = arith.constant 0 : index
    %39 = vector.load %arg6[%c0_22, %c1_23, %c0_24, %c0_25] : memref<1x8x16x16xf32, #tpu.memory_space<vmem>>, vector<1x1x16x16xf32>
    %40 = vector.shape_cast %39 : vector<1x1x16x16xf32> to vector<16x16xf32>
    %41 = vector.shape_cast %38 : vector<16x16xf32> to vector<1x1x16x16xf32>
    tpu.vector_store %arg6[%c0_22, %c1_23, %c0_24, %c0_25], %41 {strides = array<i32>} : memref<1x8x16x16xf32, #tpu.memory_space<vmem>>, vector<1x1x16x16xf32>,
    %42 = vector.extract_strided_slice %33 {offsets = [0, 32], sizes = [16, 16], strides = [1, 1]} : vector<16x128xf32> to vector<16x16xf32>
    %c0_26 = arith.constant 0 : index
    %c2_27 = arith.constant 2 : index
    %c0_28 = arith.constant 0 : index
    %c0_29 = arith.constant 0 : index
    %43 = vector.load %arg6[%c0_26, %c2_27, %c0_28, %c0_29] : memref<1x8x16x16xf32, #tpu.memory_space<vmem>>, vector<1x1x16x16xf32>
    %44 = vector.shape_cast %43 : vector<1x1x16x16xf32> to vector<16x16xf32>
    %45 = vector.shape_cast %42 : vector<16x16xf32> to vector<1x1x16x16xf32>
    tpu.vector_store %arg6[%c0_26, %c2_27, %c0_28, %c0_29], %45 {strides = array<i32>} : memref<1x8x16x16xf32, #tpu.memory_space<vmem>>, vector<1x1x16x16xf32>,
    %46 = vector.extract_strided_slice %33 {offsets = [0, 48], sizes = [16, 16], strides = [1, 1]} : vector<16x128xf32> to vector<16x16xf32>
    %c0_30 = arith.constant 0 : index
    %c3 = arith.constant 3 : index
    %c0_31 = arith.constant 0 : index
    %c0_32 = arith.constant 0 : index
    %47 = vector.load %arg6[%c0_30, %c3, %c0_31, %c0_32] : memref<1x8x16x16xf32, #tpu.memory_space<vmem>>, vector<1x1x16x16xf32>
    %48 = vector.shape_cast %47 : vector<1x1x16x16xf32> to vector<16x16xf32>
    %49 = vector.shape_cast %46 : vector<16x16xf32> to vector<1x1x16x16xf32>
    tpu.vector_store %arg6[%c0_30, %c3, %c0_31, %c0_32], %49 {strides = array<i32>} : memref<1x8x16x16xf32, #tpu.memory_space<vmem>>, vector<1x1x16x16xf32>,
    %50 = vector.extract_strided_slice %33 {offsets = [0, 64], sizes = [16, 16], strides = [1, 1]} : vector<16x128xf32> to vector<16x16xf32>
    %c0_33 = arith.constant 0 : index
    %c4 = arith.constant 4 : index
    %c0_34 = arith.constant 0 : index
    %c0_35 = arith.constant 0 : index
    %51 = vector.load %arg6[%c0_33, %c4, %c0_34, %c0_35] : memref<1x8x16x16xf32, #tpu.memory_space<vmem>>, vector<1x1x16x16xf32>
    %52 = vector.shape_cast %51 : vector<1x1x16x16xf32> to vector<16x16xf32>
    %53 = vector.shape_cast %50 : vector<16x16xf32> to vector<1x1x16x16xf32>
    tpu.vector_store %arg6[%c0_33, %c4, %c0_34, %c0_35], %53 {strides = array<i32>} : memref<1x8x16x16xf32, #tpu.memory_space<vmem>>, vector<1x1x16x16xf32>,
    %54 = vector.extract_strided_slice %33 {offsets = [0, 80], sizes = [16, 16], strides = [1, 1]} : vector<16x128xf32> to vector<16x16xf32>
    %c0_36 = arith.constant 0 : index
    %c5 = arith.constant 5 : index
    %c0_37 = arith.constant 0 : index
    %c0_38 = arith.constant 0 : index
    %55 = vector.load %arg6[%c0_36, %c5, %c0_37, %c0_38] : memref<1x8x16x16xf32, #tpu.memory_space<vmem>>, vector<1x1x16x16xf32>
    %56 = vector.shape_cast %55 : vector<1x1x16x16xf32> to vector<16x16xf32>
    %57 = vector.shape_cast %54 : vector<16x16xf32> to vector<1x1x16x16xf32>
    tpu.vector_store %arg6[%c0_36, %c5, %c0_37, %c0_38], %57 {strides = array<i32>} : memref<1x8x16x16xf32, #tpu.memory_space<vmem>>, vector<1x1x16x16xf32>,
    %58 = vector.extract_strided_slice %33 {offsets = [0, 96], sizes = [16, 16], strides = [1, 1]} : vector<16x128xf32> to vector<16x16xf32>
    %c0_39 = arith.constant 0 : index
    %c6 = arith.constant 6 : index
    %c0_40 = arith.constant 0 : index
    %c0_41 = arith.constant 0 : index
    %59 = vector.load %arg6[%c0_39, %c6, %c0_40, %c0_41] : memref<1x8x16x16xf32, #tpu.memory_space<vmem>>, vector<1x1x16x16xf32>
    %60 = vector.shape_cast %59 : vector<1x1x16x16xf32> to vector<16x16xf32>
    %61 = vector.shape_cast %58 : vector<16x16xf32> to vector<1x1x16x16xf32>
    tpu.vector_store %arg6[%c0_39, %c6, %c0_40, %c0_41], %61 {strides = array<i32>} : memref<1x8x16x16xf32, #tpu.memory_space<vmem>>, vector<1x1x16x16xf32>,
    %62 = vector.extract_strided_slice %33 {offsets = [0, 112], sizes = [16, 16], strides = [1, 1]} : vector<16x128xf32> to vector<16x16xf32>
    %c0_42 = arith.constant 0 : index
    %c7 = arith.constant 7 : index
    %c0_43 = arith.constant 0 : index
    %c0_44 = arith.constant 0 : index
    %63 = vector.load %arg6[%c0_42, %c7, %c0_43, %c0_44] : memref<1x8x16x16xf32, #tpu.memory_space<vmem>>, vector<1x1x16x16xf32>
    %64 = vector.shape_cast %63 : vector<1x1x16x16xf32> to vector<16x16xf32>
    %65 = vector.shape_cast %62 : vector<16x16xf32> to vector<1x1x16x16xf32>
    tpu.vector_store %arg6[%c0_42, %c7, %c0_43, %c0_44], %65 {strides = array<i32>} : memref<1x8x16x16xf32, #tpu.memory_space<vmem>>, vector<1x1x16x16xf32>,
    return
  }
  func.func @transform_0(%arg0: i32, %arg1: i32, %arg2: i32) -> (i32, i32, i32) {
    %c0_i32 = arith.constant 0 : i32
    %c0_i32_0 = arith.constant 0 : i32
    %c0_i32_1 = arith.constant 0 : i32
    return %arg0, %c0_i32, %c0_i32_0 : i32, i32, i32
  }
  func.func @transform_1(%arg0: i32, %arg1: i32, %arg2: i32) -> (i32, i32, i32) {
    %c0_i32 = arith.constant 0 : i32
    %c0_i32_0 = arith.constant 0 : i32
    %c0_i32_1 = arith.constant 0 : i32
    return %c0_i32, %c0_i32_0, %arg2 : i32, i32, i32
  }
  func.func @transform_2(%arg0: i32, %arg1: i32, %arg2: i32) -> (i32, i32) {
    %c0_i32 = arith.constant 0 : i32
    %c0_i32_0 = arith.constant 0 : i32
    return %c0_i32, %arg2 : i32, i32
  }
  func.func @transform_3(%arg0: i32, %arg1: i32, %arg2: i32) -> (i32, i32, i32, i32) {
    %c0_i32 = arith.constant 0 : i32
    %c0_i32_0 = arith.constant 0 : i32
    return %arg0, %c0_i32, %arg1, %arg2 : i32, i32, i32, i32
  }
}

</mosaic_0001>

<llo_original>
// kernel: conv_act.1
$region0: #{conv_act.1}
  #allocation0 [shape = 'u32[]', space=smem, size = 0x4, offset = 0x4, fixed_abs, tag = 'smem constant byte address 0x4 - core index']
  #allocation1 [shape = 'u32[144,128]{1,0:T(1,128)}', space=vmem, size = 0x12000, scoped, tag = 'internal scratch']
  %s0 = inlined_call_operand.vmem [shape: f32[2,18,128], index: 0, kind: input, shape index: {}]
  %s1 = inlined_call_operand.vmem [shape: f32[3,128,128], index: 1, kind: input, shape index: {}]
  %s2 = inlined_call_operand.vmem [shape: f32[1,128], index: 2, kind: input, shape index: {}]
  %s3 = inlined_call_operand.hbm [shape: f32[2,8,16,16], index: 3, kind: output, shape index: {}]
  %s4 = sld [smem:[#allocation0]]
  $region45: #{conv_act.1} parent=0
    _
  %s6 = ssub.s32 1, %s4
  %s7 = scalar_select 0, %s6, %s4
  $region1: #{conv_act.1} parent=0
    #allocation2 [shape = 'u8[131072]{0}', space=vmem, size = 0x20000, scoped, tag = 'output window, operand 0']
    #allocation3 [shape = 's32[2]{0}', space=sflag, size = 0x8, scoped, tag = 'scoped memory for conv_act.1']
    %8 = vsyncpa [#allocation3], 0
    %s9 = scalar_lea.sflag [#allocation3], 1
    %10 = vsyncpa %s9, 0
    loop: start=0, step=1, limit=4
    $region2: #{conv_act.1} parent=1 // loop_pre_header
      _
    $region3: #{conv_act.1} parent=1 // loop_header
      %s12 = sphi 0, %s16
      %p13 = scmp.ge.s32.totalorder %s12, 4
      %s19 = sphi 0, %s38
      %s20 = sphi 0, %s34
      %s21 = sphi 0, %s30
      %s22 = sphi 0, %s19
      %s23 = sphi 0, %s20
      %s24 = sphi 0, %s21
      %s25 = sphi 0, %s22
      %s26 = sphi 0, %s23
      %s27 = sphi 0, %s24
      %s41 = sphi 0, %s43
      %s44 = sphi 0, %s41
      %s45 = sphi 0, %s44
      %s61 = sphi 0, %s45
      %s67 = sphi 0, %s69
      %s70 = sphi 0, %s67
      %s71 = sphi 0, %s70
      %s87 = sphi 0, %s71
      %s93 = sphi 0, %s95
      %s96 = sphi 0, %s93
      %s97 = sphi 0, %s96
      %s113 = sphi 0, %s97
      %s123 = sphi 0, %s125
      %s126 = sphi 0, %s123
      %s127 = sphi 0, %s126
      %s143 = sphi 0, %s127
    $region4: #{conv_act.1} parent=1 // loop_header_branch
      %15 = sbr.rel (%p13) target = $region8
    $region5: #{conv_act.1} parent=1 // loop_body
      %s17 = ssub.s32 %s12, 1
      %s18 = ssub.s32 %s12, 2
      %s28 = sadd.s32 1, %s21
      %p29 = scmp.ge.s32.totalorder %s28, 1
      %s30 = scalar_select %p29, 0, %s28
      %s31 = sadd.s32 1, %s20
      %s32 = scalar_select %p29, %s31, %s20
      %p33 = scmp.ge.s32.totalorder %s32, 1
      %s34 = scalar_select %p33, 0, %s32
      %s35 = sadd.s32 1, %s19
      %s36 = scalar_select %p33, %s35, %s19
      %p37 = scmp.ge.s32.totalorder %s36, 2
      %s38 = scalar_select %p37, 0, %s36
      %s39 = ssub.s32 %s19, %s38
      %p40 = scmp.eq.s32.totalorder %s39, 0
      %s42 = sadd.s32 %s41, 1
      %s43 = scalar_select %p40, %s41, %s42
      %p46 = pneg %p40
      %p47 = scmp.eq.s32.totalorder %s12, 1
      %p48 = por %p46, %p47
      %p49 = scmp.ne.s32.totalorder %s41, %s44
      %p50 = scmp.eq.s32.totalorder %s12, 0
      %p51 = por %p49, %p50
      %p52 = scmp.ne.s32.totalorder %s41, %s44
      %p53 = scmp.eq.s32.totalorder %s17, 1
      %p54 = por %p52, %p53
      %p55 = scmp.ne.s32.totalorder %s44, %s45
      %p56 = scmp.eq.s32.totalorder %s17, 0
      %p57 = por %p55, %p56
      %p58 = scmp.ne.s32.totalorder %s44, %s45
      %p59 = scmp.eq.s32.totalorder %s18, 1
      %p60 = por %p58, %p59
      %p62 = scmp.ne.s32.totalorder %s45, %s61
      %p63 = scmp.eq.s32.totalorder %s18, 0
      %p64 = por %p62, %p63
      %s65 = ssub.s32 %s21, %s30
      %p66 = scmp.eq.s32.totalorder %s65, 0
      %s68 = sadd.s32 %s67, 1
      %s69 = scalar_select %p66, %s67, %s68
      %p72 = pneg %p66
      %p73 = scmp.eq.s32.totalorder %s12, 1
      %p74 = por %p72, %p73
      %p75 = scmp.ne.s32.totalorder %s67, %s70
      %p76 = scmp.eq.s32.totalorder %s12, 0
      %p77 = por %p75, %p76
      %p78 = scmp.ne.s32.totalorder %s67, %s70
      %p79 = scmp.eq.s32.totalorder %s17, 1
      %p80 = por %p78, %p79
      %p81 = scmp.ne.s32.totalorder %s70, %s71
      %p82 = scmp.eq.s32.totalorder %s17, 0
      %p83 = por %p81, %p82
      %p84 = scmp.ne.s32.totalorder %s70, %s71
      %p85 = scmp.eq.s32.totalorder %s18, 1
      %p86 = por %p84, %p85
      %p88 = scmp.ne.s32.totalorder %s71, %s87
      %p89 = scmp.eq.s32.totalorder %s18, 0
      %p90 = por %p88, %p89
      %s91 = ssub.s32 %s21, %s30
      %p92 = scmp.eq.s32.totalorder %s91, 0
      %s94 = sadd.s32 %s93, 1
      %s95 = scalar_select %p92, %s93, %s94
      %p98 = pneg %p92
      %p99 = scmp.eq.s32.totalorder %s12, 1
      %p100 = por %p98, %p99
      %p101 = scmp.ne.s32.totalorder %s93, %s96
      %p102 = scmp.eq.s32.totalorder %s12, 0
      %p103 = por %p101, %p102
      %p104 = scmp.ne.s32.totalorder %s93, %s96
      %p105 = scmp.eq.s32.totalorder %s17, 1
      %p106 = por %p104, %p105
      %p107 = scmp.ne.s32.totalorder %s96, %s97
      %p108 = scmp.eq.s32.totalorder %s17, 0
      %p109 = por %p107, %p108
      %p110 = scmp.ne.s32.totalorder %s96, %s97
      %p111 = scmp.eq.s32.totalorder %s18, 1
      %p112 = por %p110, %p111
      %p114 = scmp.ne.s32.totalorder %s97, %s113
      %p115 = scmp.eq.s32.totalorder %s18, 0
      %p116 = por %p114, %p115
      %s117 = ssub.s32 %s19, %s38
      %s118 = ssub.s32 %s20, %s34
      %s119 = sor.u32 %s117, %s118
      %s120 = ssub.s32 %s21, %s30
      %s121 = sor.u32 %s119, %s120
      %p122 = scmp.eq.s32.totalorder %s121, 0
      %s124 = sadd.s32 %s123, 1
      %s125 = scalar_select %p122, %s123, %s124
      %p128 = pneg %p122
      %p129 = scmp.eq.s32.totalorder %s12, 1
      %p130 = por %p128, %p129
      %p131 = scmp.ne.s32.totalorder %s123, %s126
      %p132 = scmp.eq.s32.totalorder %s12, 0
      %p133 = por %p131, %p132
      %p134 = scmp.ne.s32.totalorder %s123, %s126
      %p135 = scmp.eq.s32.totalorder %s17, 1
      %p136 = por %p134, %p135
      %p137 = scmp.ne.s32.totalorder %s126, %s127
      %p138 = scmp.eq.s32.totalorder %s17, 0
      %p139 = por %p137, %p138
      %p140 = scmp.ne.s32.totalorder %s126, %s127
      %p141 = scmp.eq.s32.totalorder %s18, 1
      %p142 = por %p140, %p141
      %p144 = scmp.ne.s32.totalorder %s127, %s143
      %p145 = scmp.eq.s32.totalorder %s18, 0
      %p146 = por %p144, %p145
      %p147 = scmp.le.s32.totalorder 1, %s12
      %p148 = scmp.lt.s32.totalorder %s12, 3
      %p149 = pnand %p147, %p148
      %p150 = pneg %p149
      // Predicated region
      $region9: #{conv_act.1} parent=5 // pred_check
        _
      $region10: #{conv_act.1} parent=5 // pred_check_branch
        %152 = sbr.rel (%p149) target = $region12
      $region11: #{conv_act.1} parent=5 // pred_region
        %s153 = ssub.s32 %s12, 1
        // Predicated region
        $region13: #{conv_act.1} parent=11 // pred_check
          %p154 = pneg %p83
        $region14: #{conv_act.1} parent=11 // pred_check_branch
          %156 = sbr.rel (%p154) target = $region16
        $region15: #{conv_act.1} parent=11 // pred_region
          %p157 = scmp.lt.s32.totalorder %s24, 0
          %s158 = scalar_select %p157, %s24, 0
          %s159 = smul.addr %s158, 8
          %s160 = scalar_lea.vmem %s1, %s159
        $region16: #{conv_act.1} parent=11 // pred_fallthru
          _
        // Predicated region
        $region17: #{conv_act.1} parent=11 // pred_check
          %p161 = pneg %p109
        $region18: #{conv_act.1} parent=11 // pred_check_branch
          %163 = sbr.rel (%p161) target = $region20
        $region19: #{conv_act.1} parent=11 // pred_region
          %p164 = scmp.lt.s32.totalorder %s24, 0
          %s165 = scalar_select %p164, %s24, 0
          %s166 = scalar_lea.vmem %s2, %s165
        $region20: #{conv_act.1} parent=11 // pred_fallthru
          _
      $region12: #{conv_act.1} parent=5 // pred_fallthru
        _
      %p167 = scmp.lt.s32.totalorder %s12, 2
      // Predicated region
      $region21: #{conv_act.1} parent=5 // pred_check
        %p168 = pneg %p167
      $region22: #{conv_act.1} parent=5 // pred_check_branch
        %170 = sbr.rel (%p168) target = $region24
      $region23: #{conv_act.1} parent=5 // pred_region
        // Predicated region
        $region25: #{conv_act.1} parent=23 // pred_check
          %p171 = pneg %p51
        $region26: #{conv_act.1} parent=23 // pred_check_branch
          %173 = sbr.rel (%p171) target = $region28
        $region27: #{conv_act.1} parent=23 // pred_region
          %p174 = scmp.lt.s32.totalorder %s19, 1
          %s175 = scalar_select %p174, %s19, 1
          %s176 = smul.addr %s175, 3
          %s177 = smul.addr %s176, 8
          %s178 = scalar_lea.vmem %s0, %s177
        $region28: #{conv_act.1} parent=23 // pred_fallthru
          _
      $region24: #{conv_act.1} parent=5 // pred_fallthru
        _
      %p179 = scmp.le.s32.totalorder 1, %s12
      %p180 = scmp.lt.s32.totalorder %s12, 3
      %p181 = pnand %p179, %p180
      %p182 = pneg %p181
      // Predicated region
      $region29: #{conv_act.1} parent=5 // pred_check
        _
      $region30: #{conv_act.1} parent=5 // pred_check_branch
        %184 = sbr.rel (%p181) target = $region32
      $region31: #{conv_act.1} parent=5 // pred_region
        %s185 = ssub.s32 %s12, 1
        %p186 = scmp.lt.s32.totalorder %s22, 1
        %s187 = scalar_select %p186, %s22, 1
        %s188 = smul.addr %s187, 3
        %s189 = smul.addr %s188, 8
        %s190 = scalar_lea.vmem %s0, %s189
        %p191 = pneg %p57
        %p192 = pneg %p54
        %p193 = scmp.lt.s32.totalorder %s24, 0
        %s194 = scalar_select %p193, %s24, 0
        %s195 = smul.addr %s194, 8
        %s196 = scalar_lea.vmem %s1, %s195
        %p197 = pneg %p83
        %p198 = pneg %p80
        %p199 = scmp.lt.s32.totalorder %s24, 0
        %s200 = scalar_select %p199, %s24, 0
        %s201 = scalar_lea.vmem %s2, %s200
        %p202 = pneg %p109
        %p203 = pneg %p106
        %p204 = pneg %p139
        %p205 = pneg %p136
        %s206 = sand.u32 %s126, 1
        %s207 = scalar_lea.sflag [#allocation3], %s206
        %s208 = sand.u32 %s126, 1
        %s209 = smul.addr %s208, 128
        %s210 = scalar_lea.vmem [#allocation2], %s209
        %p211 = scmp.lt.s32.totalorder %s22, 1
        %s212 = scalar_select %p211, %s22, 1
        %s213 = smul.addr %s212, 3
        %s214 = smul.addr %s213, 8
        %s215 = scalar_lea.vmem %s0, %s214
        %p216 = scmp.lt.s32.totalorder %s24, 0
        %s217 = scalar_select %p216, %s24, 0
        %s218 = smul.addr %s217, 8
        %s219 = scalar_lea.vmem %s1, %s218
        %p220 = scmp.lt.s32.totalorder %s24, 0
        %s221 = scalar_select %p220, %s24, 0
        %s222 = scalar_lea.vmem %s2, %s221
        %s223 = smul.u32 2, %s23
        %s224 = smul.u32 %s23, 16
        %s225 = scalar_lea.vmem %s215, %s224
        %v226 = vld [vmem:[%s225] sm:$0xff]
        %v227 = vld [vmem:[%s225 + $0x8] sm:$0xff]
        %v228 = vld [vmem:[%s219] sm:$0xff]
        %v229 = vld [vmem:[%s219 + $0x8] sm:$0xff]
        %v230 = vld [vmem:[%s219 + $0x10] sm:$0xff]
        %v231 = vld [vmem:[%s219 + $0x18] sm:$0xff]
        %v232 = vld [vmem:[%s219 + $0x20] sm:$0xff]
        %v233 = vld [vmem:[%s219 + $0x28] sm:$0xff]
        %v234 = vld [vmem:[%s219 + $0x30] sm:$0xff]
        %v235 = vld [vmem:[%s219 + $0x38] sm:$0xff]
        %v236 = vld [vmem:[%s219 + $0x40] sm:$0xff]
        %v237 = vld [vmem:[%s219 + $0x48] sm:$0xff]
        %v238 = vld [vmem:[%s219 + $0x50] sm:$0xff]
        %v239 = vld [vmem:[%s219 + $0x58] sm:$0xff]
        %v240 = vld [vmem:[%s219 + $0x60] sm:$0xff]
        %v241 = vld [vmem:[%s219 + $0x68] sm:$0xff]
        %v242 = vld [vmem:[%s219 + $0x70] sm:$0xff]
        %v243 = vld [vmem:[%s219 + $0x78] sm:$0xff]
        %s244 = sadd.s32 %s224, 1
        %s245 = scalar_lea.vmem %s215, %s244
        %v246 = vld [vmem:[%s245] sm:$0xff]
        %v247 = vld [vmem:[%s245 + $0x8] sm:$0xff]
        %s248 = scalar_lea.vmem %s219, 128
        %v249 = vld [vmem:[%s248] sm:$0xff]
        %v250 = vld [vmem:[%s248 + $0x8] sm:$0xff]
        %v251 = vld [vmem:[%s248 + $0x10] sm:$0xff]
        %v252 = vld [vmem:[%s248 + $0x18] sm:$0xff]
        %v253 = vld [vmem:[%s248 + $0x20] sm:$0xff]
        %v254 = vld [vmem:[%s248 + $0x28] sm:$0xff]
        %v255 = vld [vmem:[%s248 + $0x30] sm:$0xff]
        %v256 = vld [vmem:[%s248 + $0x38] sm:$0xff]
        %v257 = vld [vmem:[%s248 + $0x40] sm:$0xff]
        %v258 = vld [vmem:[%s248 + $0x48] sm:$0xff]
        %v259 = vld [vmem:[%s248 + $0x50] sm:$0xff]
        %v260 = vld [vmem:[%s248 + $0x58] sm:$0xff]
        %v261 = vld [vmem:[%s248 + $0x60] sm:$0xff]
        %v262 = vld [vmem:[%s248 + $0x68] sm:$0xff]
        %v263 = vld [vmem:[%s248 + $0x70] sm:$0xff]
        %v264 = vld [vmem:[%s248 + $0x78] sm:$0xff]
        %265 = vmatprep.subr.mxu0 0.0
        %266 = vmatpush1.msra.mxu0 %v249
        %267 = vmatprep.subr.mxu0 0.0
        %268 = vmatpush1.msra.mxu0 %v250
        %269 = vmatprep.subr.mxu0 0.0
        %270 = vmatpush1.msra.mxu0 %v251
        %271 = vmatprep.subr.mxu0 0.0
        %272 = vmatpush1.msra.mxu0 %v252
        %273 = vmatprep.subr.mxu0 0.0
        %274 = vmatpush1.msra.mxu0 %v253
        %275 = vmatprep.subr.mxu0 0.0
        %276 = vmatpush1.msra.mxu0 %v254
        %277 = vmatprep.subr.mxu0 0.0
        %278 = vmatpush1.msra.mxu0 %v255
        %279 = vmatprep.subr.mxu0 0.0
        %280 = vmatpush1.msra.mxu0 %v256
        %281 = vmatprep.subr.mxu0 0.0
        %282 = vmatpush1.msra.mxu0 %v257
        %283 = vmatprep.subr.mxu0 0.0
        %284 = vmatpush1.msra.mxu0 %v258
        %285 = vmatprep.subr.mxu0 0.0
        %286 = vmatpush1.msra.mxu0 %v259
        %287 = vmatprep.subr.mxu0 0.0
        %288 = vmatpush1.msra.mxu0 %v260
        %289 = vmatprep.subr.mxu0 0.0
        %290 = vmatpush1.msra.mxu0 %v261
        %291 = vmatprep.subr.mxu0 0.0
        %292 = vmatpush1.msra.mxu0 %v262
        %293 = vmatprep.subr.mxu0 0.0
        %294 = vmatpush1.msra.mxu0 %v263
        %295 = vmatprep.subr.mxu0 0.0
        %296 = vmatpush1.msra.mxu0 %v264
        %297 = vmatprep.subr.mxu0 0.0
        %298 = vmatpush1.msra.mxu0 0.0
        %299 = vmatprep.subr.mxu0 0.0
        %300 = vmatpush1.msra.mxu0 0.0
        %301 = vmatprep.subr.mxu0 0.0
        %302 = vmatpush1.msra.mxu0 0.0
        %303 = vmatprep.subr.mxu0 0.0
        %304 = vmatpush1.msra.mxu0 0.0
        %305 = vmatprep.subr.mxu0 0.0
        %306 = vmatpush1.msra.mxu0 0.0
        %307 = vmatprep.subr.mxu0 0.0
        %308 = vmatpush1.msra.mxu0 0.0
        %309 = vmatprep.subr.mxu0 0.0
        %310 = vmatpush1.msra.mxu0 0.0
        %311 = vmatprep.subr.mxu0 0.0
        %312 = vmatpush1.msra.mxu0 0.0
        %313 = vmatprep.subr.mxu0 0.0
        %314 = vmatpush1.msra.mxu0 0.0
        %315 = vmatprep.subr.mxu0 0.0
        %316 = vmatpush1.msra.mxu0 0.0
        %317 = vmatprep.subr.mxu0 0.0
        %318 = vmatpush1.msra.mxu0 0.0
        %319 = vmatprep.subr.mxu0 0.0
        %320 = vmatpush1.msra.mxu0 0.0
        %321 = vmatprep.subr.mxu0 0.0
        %322 = vmatpush1.msra.mxu0 0.0
        %323 = vmatprep.subr.mxu0 0.0
        %324 = vmatpush1.msra.mxu0 0.0
        %325 = vmatprep.subr.mxu0 0.0
        %326 = vmatpush1.msra.mxu0 0.0
        %327 = vmatprep.subr.mxu0 0.0
        %328 = vmatpush1.msra.mxu0 0.0
        %329 = vmatprep.mubr.f32.mxu0 0.0
        %330 = vmatmul.mubr.f32.gmra.mrb[0].mxu0 %v246
        %v331 = vpop.f32.mrb[0].mxu0
        %v332 = vadd.f32 0.0, %v331
        %v333 = vpop.f32.mrb[0].mxu0
        %334 = vmatprep.mubr.f32.mxu0 0.0
        %335 = vmatmul.mubr.f32.gmra.mrb[0].mxu0 %v247
        %v336 = vpop.f32.mrb[0].mxu0
        %v337 = vadd.f32 0.0, %v336
        %v338 = vpop.f32.mrb[0].mxu0
        %339 = vdwg.mxu0
        %340 = vmatprep.subr.mxu0 0.0
        %341 = vmatpush1.msra.mxu0 %v228
        %342 = vmatprep.subr.mxu0 0.0
        %343 = vmatpush1.msra.mxu0 %v229
        %344 = vmatprep.subr.mxu0 0.0
        %345 = vmatpush1.msra.mxu0 %v230
        %346 = vmatprep.subr.mxu0 0.0
        %347 = vmatpush1.msra.mxu0 %v231
        %348 = vmatprep.subr.mxu0 0.0
        %349 = vmatpush1.msra.mxu0 %v232
        %350 = vmatprep.subr.mxu0 0.0
        %351 = vmatpush1.msra.mxu0 %v233
        %352 = vmatprep.subr.mxu0 0.0
        %353 = vmatpush1.msra.mxu0 %v234
        %354 = vmatprep.subr.mxu0 0.0
        %355 = vmatpush1.msra.mxu0 %v235
        %356 = vmatprep.subr.mxu0 0.0
        %357 = vmatpush1.msra.mxu0 %v236
        %358 = vmatprep.subr.mxu0 0.0
        %359 = vmatpush1.msra.mxu0 %v237
        %360 = vmatprep.subr.mxu0 0.0
        %361 = vmatpush1.msra.mxu0 %v238
        %362 = vmatprep.subr.mxu0 0.0
        %363 = vmatpush1.msra.mxu0 %v239
        %364 = vmatprep.subr.mxu0 0.0
        %365 = vmatpush1.msra.mxu0 %v240
        %366 = vmatprep.subr.mxu0 0.0
        %367 = vmatpush1.msra.mxu0 %v241
        %368 = vmatprep.subr.mxu0 0.0
        %369 = vmatpush1.msra.mxu0 %v242
        %370 = vmatprep.subr.mxu0 0.0
        %371 = vmatpush1.msra.mxu0 %v243
        %372 = vmatprep.subr.mxu0 0.0
        %373 = vmatpush1.msra.mxu0 0.0
        %374 = vmatprep.subr.mxu0 0.0
        %375 = vmatpush1.msra.mxu0 0.0
        %376 = vmatprep.subr.mxu0 0.0
        %377 = vmatpush1.msra.mxu0 0.0
        %378 = vmatprep.subr.mxu0 0.0
        %379 = vmatpush1.msra.mxu0 0.0
        %380 = vmatprep.subr.mxu0 0.0
        %381 = vmatpush1.msra.mxu0 0.0
        %382 = vmatprep.subr.mxu0 0.0
        %383 = vmatpush1.msra.mxu0 0.0
        %384 = vmatprep.subr.mxu0 0.0
        %385 = vmatpush1.msra.mxu0 0.0
        %386 = vmatprep.subr.mxu0 0.0
        %387 = vmatpush1.msra.mxu0 0.0
        %388 = vmatprep.subr.mxu0 0.0
        %389 = vmatpush1.msra.mxu0 0.0
        %390 = vmatprep.subr.mxu0 0.0
        %391 = vmatpush1.msra.mxu0 0.0
        %392 = vmatprep.subr.mxu0 0.0
        %393 = vmatpush1.msra.mxu0 0.0
        %394 = vmatprep.subr.mxu0 0.0
        %395 = vmatpush1.msra.mxu0 0.0
        %396 = vmatprep.subr.mxu0 0.0
        %397 = vmatpush1.msra.mxu0 0.0
        %398 = vmatprep.subr.mxu0 0.0
        %399 = vmatpush1.msra.mxu0 0.0
        %400 = vmatprep.subr.mxu0 0.0
        %401 = vmatpush1.msra.mxu0 0.0
        %402 = vmatprep.subr.mxu0 0.0
        %403 = vmatpush1.msra.mxu0 0.0
        %404 = vmatprep.mubr.f32.mxu0 0.0
        %405 = vmatmul.mubr.f32.gmra.mrb[0].mxu0 %v226
        %v406 = vpop.f32.mrb[0].mxu0
        %v407 = vadd.f32 %v332, %v406
        %v408 = vpop.f32.mrb[0].mxu0
        %409 = vmatprep.mubr.f32.mxu0 0.0
        %410 = vmatmul.mubr.f32.gmra.mrb[0].mxu0 %v227
        %v411 = vpop.f32.mrb[0].mxu0
        %v412 = vadd.f32 %v337, %v411
        %v413 = vpop.f32.mrb[0].mxu0
        %414 = vdwg.mxu0
        %s415 = sadd.s32 %s224, 2
        %s416 = scalar_lea.vmem %s215, %s415
        %v417 = vld [vmem:[%s416] sm:$0xff]
        %v418 = vld [vmem:[%s416 + $0x8] sm:$0xff]
        %s419 = scalar_lea.vmem %s219, 256
        %v420 = vld [vmem:[%s419] sm:$0xff]
        %v421 = vld [vmem:[%s419 + $0x8] sm:$0xff]
        %v422 = vld [vmem:[%s419 + $0x10] sm:$0xff]
        %v423 = vld [vmem:[%s419 + $0x18] sm:$0xff]
        %v424 = vld [vmem:[%s419 + $0x20] sm:$0xff]
        %v425 = vld [vmem:[%s419 + $0x28] sm:$0xff]
        %v426 = vld [vmem:[%s419 + $0x30] sm:$0xff]
        %v427 = vld [vmem:[%s419 + $0x38] sm:$0xff]
        %v428 = vld [vmem:[%s419 + $0x40] sm:$0xff]
        %v429 = vld [vmem:[%s419 + $0x48] sm:$0xff]
        %v430 = vld [vmem:[%s419 + $0x50] sm:$0xff]
        %v431 = vld [vmem:[%s419 + $0x58] sm:$0xff]
        %v432 = vld [vmem:[%s419 + $0x60] sm:$0xff]
        %v433 = vld [vmem:[%s419 + $0x68] sm:$0xff]
        %v434 = vld [vmem:[%s419 + $0x70] sm:$0xff]
        %v435 = vld [vmem:[%s419 + $0x78] sm:$0xff]
        %436 = vmatprep.subr.mxu0 0.0
        %437 = vmatpush1.msra.mxu0 %v420
        %438 = vmatprep.subr.mxu0 0.0
        %439 = vmatpush1.msra.mxu0 %v421
        %440 = vmatprep.subr.mxu0 0.0
        %441 = vmatpush1.msra.mxu0 %v422
        %442 = vmatprep.subr.mxu0 0.0
        %443 = vmatpush1.msra.mxu0 %v423
        %444 = vmatprep.subr.mxu0 0.0
        %445 = vmatpush1.msra.mxu0 %v424
        %446 = vmatprep.subr.mxu0 0.0
        %447 = vmatpush1.msra.mxu0 %v425
        %448 = vmatprep.subr.mxu0 0.0
        %449 = vmatpush1.msra.mxu0 %v426
        %450 = vmatprep.subr.mxu0 0.0
        %451 = vmatpush1.msra.mxu0 %v427
        %452 = vmatprep.subr.mxu0 0.0
        %453 = vmatpush1.msra.mxu0 %v428
        %454 = vmatprep.subr.mxu0 0.0
        %455 = vmatpush1.msra.mxu0 %v429
        %456 = vmatprep.subr.mxu0 0.0
        %457 = vmatpush1.msra.mxu0 %v430
        %458 = vmatprep.subr.mxu0 0.0
        %459 = vmatpush1.msra.mxu0 %v431
        %460 = vmatprep.subr.mxu0 0.0
        %461 = vmatpush1.msra.mxu0 %v432
        %462 = vmatprep.subr.mxu0 0.0
        %463 = vmatpush1.msra.mxu0 %v433
        %464 = vmatprep.subr.mxu0 0.0
        %465 = vmatpush1.msra.mxu0 %v434
        %466 = vmatprep.subr.mxu0 0.0
        %467 = vmatpush1.msra.mxu0 %v435
        %468 = vmatprep.subr.mxu0 0.0
        %469 = vmatpush1.msra.mxu0 0.0
        %470 = vmatprep.subr.mxu0 0.0
        %471 = vmatpush1.msra.mxu0 0.0
        %472 = vmatprep.subr.mxu0 0.0
        %473 = vmatpush1.msra.mxu0 0.0
        %474 = vmatprep.subr.mxu0 0.0
        %475 = vmatpush1.msra.mxu0 0.0
        %476 = vmatprep.subr.mxu0 0.0
        %477 = vmatpush1.msra.mxu0 0.0
        %478 = vmatprep.subr.mxu0 0.0
        %479 = vmatpush1.msra.mxu0 0.0
        %480 = vmatprep.subr.mxu0 0.0
        %481 = vmatpush1.msra.mxu0 0.0
        %482 = vmatprep.subr.mxu0 0.0
        %483 = vmatpush1.msra.mxu0 0.0
        %484 = vmatprep.subr.mxu0 0.0
        %485 = vmatpush1.msra.mxu0 0.0
        %486 = vmatprep.subr.mxu0 0.0
        %487 = vmatpush1.msra.mxu0 0.0
        %488 = vmatprep.subr.mxu0 0.0
        %489 = vmatpush1.msra.mxu0 0.0
        %490 = vmatprep.subr.mxu0 0.0
        %491 = vmatpush1.msra.mxu0 0.0
        %492 = vmatprep.subr.mxu0 0.0
        %493 = vmatpush1.msra.mxu0 0.0
        %494 = vmatprep.subr.mxu0 0.0
        %495 = vmatpush1.msra.mxu0 0.0
        %496 = vmatprep.subr.mxu0 0.0
        %497 = vmatpush1.msra.mxu0 0.0
        %498 = vmatprep.subr.mxu0 0.0
        %499 = vmatpush1.msra.mxu0 0.0
        %500 = vmatprep.mubr.f32.mxu0 0.0
        %501 = vmatmul.mubr.f32.gmra.mrb[0].mxu0 %v417
        %v502 = vpop.f32.mrb[0].mxu0
        %v503 = vadd.f32 0.0, %v502
        %v504 = vpop.f32.mrb[0].mxu0
        %505 = vmatprep.mubr.f32.mxu0 0.0
        %506 = vmatmul.mubr.f32.gmra.mrb[0].mxu0 %v418
        %v507 = vpop.f32.mrb[0].mxu0
        %v508 = vadd.f32 0.0, %v507
        %v509 = vpop.f32.mrb[0].mxu0
        %510 = vdwg.mxu0
        %v511 = vadd.f32 %v407, %v503
        %v512 = vadd.f32 %v412, %v508
        %v513 = vld [vmem:[%s222] sm:$0x1]
        %v515 = vlaneseq
        %v516 = vshrl.u32 %v515, 7
        %v517 = vsub.s32 0, %v516
        %v518 = vrot.slane %v513, %v517
        %v520 = vadd.f32 %v511, %v518
        %v521 = vadd.f32 %v512, %v518
        %v522 = vand.u32 2147483647, %v520
        %v523 = vand.u32 2147483647, %v521
        %v524 = vadd.f32 %v522, 1.0
        %v525 = vadd.f32 %v523, 1.0
        %v526 = vrcp.pop %v524
        %v527 = vmul.f32 %v520, %v526
        %v528 = vrcp.pop %v525
        %v529 = vmul.f32 %v521, %v528
        %vm530 = vcmask 130048
        %531 = vst.msk [vmem:[%s210] sm:$0xff] %vm530, %v527
        %532 = vst.msk [vmem:[%s210 + $0x8] sm:$0xff] %vm530, %v529
        %535 = vrot.lane.b32.xlu0 %v527, 112
        %v536 = vpop.permute.xlu0 %535
        %537 = vrot.lane.b32.xlu0 %v529, 112
        %v538 = vpop.permute.xlu0 %537
        %s541 = scalar_lea.vmem %s210, 16 [#allocation2]
        %542 = vst.msk [vmem:[%s541] sm:$0xff] %vm530, %v536
        %543 = vst.msk [vmem:[%s541 + $0x8] sm:$0xff] %vm530, %v538
        %544 = vrot.lane.b32.xlu0 %v527, 96
        %v545 = vpop.permute.xlu0 %544
        %546 = vrot.lane.b32.xlu0 %v529, 96
        %v547 = vpop.permute.xlu0 %546
        %s550 = scalar_lea.vmem %s210, 32 [#allocation2]
        %551 = vst.msk [vmem:[%s550] sm:$0xff] %vm530, %v545
        %552 = vst.msk [vmem:[%s550 + $0x8] sm:$0xff] %vm530, %v547
        %553 = vrot.lane.b32.xlu0 %v527, 80
        %v554 = vpop.permute.xlu0 %553
        %555 = vrot.lane.b32.xlu0 %v529, 80
        %v556 = vpop.permute.xlu0 %555
        %s559 = scalar_lea.vmem %s210, 48 [#allocation2]
        %560 = vst.msk [vmem:[%s559] sm:$0xff] %vm530, %v554
        %561 = vst.msk [vmem:[%s559 + $0x8] sm:$0xff] %vm530, %v556
        %562 = vrot.lane.b32.xlu0 %v527, 64
        %v563 = vpop.permute.xlu0 %562
        %564 = vrot.lane.b32.xlu0 %v529, 64
        %v565 = vpop.permute.xlu0 %564
        %s568 = scalar_lea.vmem %s210, 64 [#allocation2]
        %569 = vst.msk [vmem:[%s568] sm:$0xff] %vm530, %v563
        %570 = vst.msk [vmem:[%s568 + $0x8] sm:$0xff] %vm530, %v565
        %571 = vrot.lane.b32.xlu0 %v527, 48
        %v572 = vpop.permute.xlu0 %571
        %573 = vrot.lane.b32.xlu0 %v529, 48
        %v574 = vpop.permute.xlu0 %573
        %s577 = scalar_lea.vmem %s210, 80 [#allocation2]
        %578 = vst.msk [vmem:[%s577] sm:$0xff] %vm530, %v572
        %579 = vst.msk [vmem:[%s577 + $0x8] sm:$0xff] %vm530, %v574
        %580 = vrot.lane.b32.xlu0 %v527, 32
        %v581 = vpop.permute.xlu0 %580
        %582 = vrot.lane.b32.xlu0 %v529, 32
        %v583 = vpop.permute.xlu0 %582
        %s586 = scalar_lea.vmem %s210, 96 [#allocation2]
        %587 = vst.msk [vmem:[%s586] sm:$0xff] %vm530, %v581
        %588 = vst.msk [vmem:[%s586 + $0x8] sm:$0xff] %vm530, %v583
        %589 = vrot.lane.b32.xlu0 %v527, 16
        %v590 = vpop.permute.xlu0 %589
        %591 = vrot.lane.b32.xlu0 %v529, 16
        %v592 = vpop.permute.xlu0 %591
        %s595 = scalar_lea.vmem %s210, 112 [#allocation2]
        %596 = vst.msk [vmem:[%s595] sm:$0xff] %vm530, %v590
        %597 = vst.msk [vmem:[%s595 + $0x8] sm:$0xff] %vm530, %v592
        %s598 = sand.u32 %s126, 1
        %s599 = scalar_lea.sflag [#allocation3], %s598
        %s600 = sand.u32 %s126, 1
        %s601 = smul.addr %s600, 128
        %s602 = scalar_lea.vmem [#allocation2], %s601
        // Predicated region
        $region33: #{conv_act.1} parent=31 // pred_check
          %p603 = pneg %p136
        $region34: #{conv_act.1} parent=31 // pred_check_branch
          %605 = sbr.rel (%p603) target = $region36
        $region35: #{conv_act.1} parent=31 // pred_region
          %s606 = smul.u32 2, %s23
          %s608 = ssub.s32 2048, 2048
          %609 = vsyncadd %s599, %s608
          %s610 = sadd.s32 %s24, %s606
          %s611 = smul.addr %s22, 16
          %s612 = sadd.s32 %s610, %s611
          %s613 = smul.addr %s612, 128
          %s614 = scalar_lea.hbm %s3, %s613
          %s615 = sshll.u32 %s602, 4
          %s616 = int_to_ptr.vmem [resolvable:$true] %s615
          %621 = dma.vmem_to_hbm [thread:$0]  %s616, 2048, %s614, %s599, 128, 128, 8
        $region36: #{conv_act.1} parent=31 // pred_fallthru
          _
      $region32: #{conv_act.1} parent=5 // pred_fallthru
        _
      %p622 = scmp.le.s32.totalorder 2, %s12
      // Predicated region
      $region37: #{conv_act.1} parent=5 // pred_check
        %p623 = pneg %p622
      $region38: #{conv_act.1} parent=5 // pred_check_branch
        %625 = sbr.rel (%p623) target = $region40
      $region39: #{conv_act.1} parent=5 // pred_region
        %s626 = ssub.s32 %s12, 2
        // Predicated region
        $region41: #{conv_act.1} parent=39 // pred_check
          %p627 = pneg %p142
        $region42: #{conv_act.1} parent=39 // pred_check_branch
          %629 = sbr.rel (%p627) target = $region44
        $region43: #{conv_act.1} parent=39 // pred_region
          %s630 = sand.u32 %s127, 1
          %s631 = scalar_lea.sflag [#allocation3], %s630
          %s632 = sand.u32 %s127, 1
          %s633 = smul.addr %s632, 128
          %s634 = scalar_lea.vmem [#allocation2], %s633
          %635 = dma.done %s631, 2048
        $region44: #{conv_act.1} parent=39 // pred_fallthru
          _
      $region40: #{conv_act.1} parent=5 // pred_fallthru
        _
    $region6: #{conv_act.1} parent=1 // loop_footer
      %s16 = sadd.s32 1, %s12
    $region7: #{conv_act.1} parent=1 // loop_footer_branch
      %11 = sbr.rel target = $region3
    $region8: #{conv_act.1} parent=1 // loop_exit
      _
    %636 = vsyncpa [#allocation3], 1
    %s637 = scalar_lea.sflag [#allocation3], 1
    %638 = vsyncpa %s637, 1

</llo_original>
